<compile_context>
chip_gen: v7x
topology: tpu7x:2x2x1
jax: 0.10.0
libtpu: 0.0.40
codegen_flags: <defaults>
</compile_context>

<pallas_src>
from functools import partial

import jax
import jax.numpy as jnp
from jax.experimental import pallas as pl
from jax.experimental.pallas import tpu as pltpu


def _general_relu_kernel(x_ref, o_ref, *, leak, sub, maxv):
    x = x_ref[...]
    if leak is not None:
        leak_c = jnp.asarray(leak, x.dtype)
        if 0.0 <= float(leak) <= 1.0:
            # x >= 0: leak*x <= x ; x < 0: leak*x >= x  ->  identical to leaky_relu,
            # one mul + one max instead of compare + select.
            y = jnp.maximum(x, x * leak_c)
        else:
            y = jnp.where(x >= 0, x, x * leak_c)
    else:
        # F.relu(x)
        y = jnp.maximum(x, jnp.zeros((), x.dtype))
    if sub is not None:
        y = y - jnp.asarray(sub, x.dtype)
    if maxv is not None:
        # clamp_max_(maxv)
        y = jnp.minimum(y, jnp.asarray(maxv, x.dtype))
    o_ref[...] = y


def _general_relu_ref(x, leak=None, sub=None, maxv=None):
    """Pure-JAX reference matching the PyTorch forward."""
    if leak is not None:
        y = jnp.where(x >= 0, x, x * jnp.asarray(leak, x.dtype))
    else:
        y = jnp.maximum(x, jnp.zeros((), x.dtype))
    if sub is not None:
        y = y - jnp.asarray(sub, x.dtype)
    if maxv is not None:
        y = jnp.minimum(y, jnp.asarray(maxv, x.dtype))
    return y


def general_relu(x, leak=None, sub=None, maxv=None, *,
                 block_bytes=2 * 1024 * 1024, min_pallas_elems=0):
    """Apply GeneralRelu elementwise via a Pallas TPU kernel.

    x: any-shaped array (e.g. NCHW activations). leak/sub/maxv are Python
    scalars or None, matching the PyTorch module's __init__ arguments.
    block_bytes bounds one VMEM block; min_pallas_elems > 0 routes tiny
    inputs to plain XLA so they can fuse with adjacent ops.
    """
    orig_shape = x.shape
    dtype = x.dtype
    n = x.size

    if n == 0 or n < min_pallas_elems:
        return _general_relu_ref(x, leak, sub, maxv)

    LANES = 128
    itemsize = jnp.dtype(dtype).itemsize
    native_sub = max(8, 32 // itemsize)  # sublane tile: 8 f32 / 16 bf16 / 32 int8

    flat = jnp.ravel(x)  # contiguous flatten: layout bitcast, no extra HBM copy
    lane_pad = (-n) % LANES
    if lane_pad:
        # Rare path (size not lane-divisible): one small tail pad + tail slice.
        flat = jnp.concatenate([flat, jnp.zeros((lane_pad,), dtype)])
    rows = flat.size // LANES
    x2d = flat.reshape(rows, LANES)

    # Largest row tile with one block <= block_bytes, rounded down to the
    # dtype-native sublane multiple.
    max_rows = max(native_sub,
                   (block_bytes // (LANES * itemsize)) // native_sub * native_sub)
    if rows <= max_rows:
        tr = rows          # single block == full array dims (always legal)
    else:
        tr = max_rows      # ragged last block handled by masked writeback
    grid = (pl.cdiv(rows, tr),)

    kernel = partial(_general_relu_kernel, leak=leak, sub=sub, maxv=maxv)

    out2d = pl.pallas_call(
        kernel,
        out_shape=jax.ShapeDtypeStruct((rows, LANES), dtype),
        grid_spec=pltpu.PrefetchScalarGridSpec(
            num_scalar_prefetch=0,
            grid=grid,
            in_specs=[pl.BlockSpec((tr, LANES), lambda i: (i, 0))],
            out_specs=pl.BlockSpec((tr, LANES), lambda i: (i, 0)),
        ),
        compiler_params=pltpu.CompilerParams(
            dimension_semantics=("parallel",),
        ),
    )(x2d)

    out = out2d.reshape(-1)
    if lane_pad:
        out = out[:n]
    return out.reshape(orig_shape)


if __name__ == "__main__":
    key = jax.random.PRNGKey(0)
    k1, k2, k3 = jax.random.split(key, 3)

    tests = []

    # NCHW activations (2*4*16*16 = 2048, lane-divisible -> zero-copy path).
    x_nchw = jax.random.normal(k1, (2, 4, 16, 16), dtype=jnp.float32)
    # Typical miniai config GeneralRelu(leak=0.1, sub=0.4, maxv=6.0) and default (plain ReLU).
    tests.append((x_nchw, dict(leak=0.1, sub=0.4, maxv=6.0), {}))
    tests.append((x_nchw, dict(leak=None, sub=None, maxv=None), {}))

    # bf16 activations: exercises the 16-row native sublane tile.
    tests.append((x_nchw.astype(jnp.bfloat16), dict(leak=0.1, sub=0.4, maxv=6.0), {}))

    # Ragged multi-step grid: 3*5*128 = 1920 elems -> rows=15; tiny block_bytes
    # forces tr=8, grid=2 with a masked 7-row last block.
    x_ragged = jax.random.normal(k2, (3, 5, 128), dtype=jnp.float32)
    tests.append((x_ragged, dict(leak=0.2, sub=None, maxv=3.0),
                  dict(block_bytes=4096)))

    # Not lane-divisible (2*3*5*7 = 210 elems) -> tail-pad fallback path.
    x_odd = jax.random.normal(k3, (2, 3, 5, 7), dtype=jnp.float32)
    tests.append((x_odd, dict(leak=0.1, sub=0.4, maxv=6.0), {}))

    for x, cfg, kw in tests:
        out = jax.block_until_ready(general_relu(x, **cfg, **kw))
        ref = _general_relu_ref(x, **cfg)
        assert out.shape == x.shape and out.dtype == x.dtype, (cfg, kw)
        tol = 1e-6 if x.dtype == jnp.float32 else 1e-2
        assert jnp.allclose(out.astype(jnp.float32), ref.astype(jnp.float32),
                            atol=tol, rtol=tol), (cfg, kw)

    print("KERNEL_OK")
</pallas_src>

<mosaic_0001>
module attributes {stable_mosaic.version = 11 : i64} {
  func.func @_general_relu_kernel(%arg0: i32, %arg1: memref<16x128xf32, #tpu.memory_space<vmem>>, %arg2: memref<16x128xf32, #tpu.memory_space<vmem>>) attributes {dimension_semantics = [#tpu.dimension_semantics<parallel>], iteration_bounds = array<i64: 1>, scalar_prefetch = 0 : i64, scratch_operands = 0 : i64, tpu.core_type = #tpu.core_type<tc>, window_params = [{transform_indices = @transform_0, window_bounds = array<i64: 16, 128>}, {transform_indices = @transform_1, window_bounds = array<i64: 16, 128>}]} {
    %c0 = arith.constant 0 : index
    %c0_0 = arith.constant 0 : index
    %0 = vector.load %arg1[%c0, %c0_0] : memref<16x128xf32, #tpu.memory_space<vmem>>, vector<16x128xf32>
    %cst = arith.constant 1.000000e-01 : f32
    %1 = vector.broadcast %cst : f32 to vector<16x128xf32>
    %2 = arith.mulf %0, %1 : vector<16x128xf32>
    %3 = arith.maximumf %0, %2 : vector<16x128xf32>
    %cst_1 = arith.constant 4.000000e-01 : f32
    %4 = vector.broadcast %cst_1 : f32 to vector<16x128xf32>
    %5 = arith.subf %3, %4 : vector<16x128xf32>
    %cst_2 = arith.constant 6.000000e+00 : f32
    %6 = vector.broadcast %cst_2 : f32 to vector<16x128xf32>
    %7 = arith.minimumf %5, %6 : vector<16x128xf32>
    %c0_3 = arith.constant 0 : index
    %c0_4 = arith.constant 0 : index
    %8 = vector.load %arg2[%c0_3, %c0_4] : memref<16x128xf32, #tpu.memory_space<vmem>>, vector<16x128xf32>
    tpu.vector_store %arg2[%c0_3, %c0_4], %7 {strides = array<i32>} : memref<16x128xf32, #tpu.memory_space<vmem>>, vector<16x128xf32>,
    return
  }
  func.func @transform_0(%arg0: i32) -> (i32, i32) {
    %c0_i32 = arith.constant 0 : i32
    %c0_i32_0 = arith.constant 0 : i32
    return %arg0, %c0_i32 : i32, i32
  }
  func.func @transform_1(%arg0: i32) -> (i32, i32) {
    %c0_i32 = arith.constant 0 : i32
    %c0_i32_0 = arith.constant 0 : i32
    return %arg0, %c0_i32 : i32, i32
  }
}

</mosaic_0001>

<llo_original>
// kernel: tpu_custom_call.1
$region0: #{tpu_custom_call.1}
  #allocation0 [shape = 'u32[]', space=smem, size = 0x4, offset = 0x4, fixed_abs, tag = 'smem constant byte address 0x4 - core index']
  #allocation1 [shape = 'u32[144,128]{1,0:T(1,128)}', space=vmem, size = 0x12000, scoped, tag = 'internal scratch']
  %s0 = inlined_call_operand.hbm [shape: f32[16,128], index: 0, kind: input, shape index: {}]
  %s1 = inlined_call_operand.hbm [shape: f32[16,128], index: 1, kind: output, shape index: {}]
  %s2 = sld [smem:[#allocation0]]
  $region18: #{tpu_custom_call.1} parent=0
    _
  %s4 = ssub.s32 1, %s2
  %s5 = scalar_select 0, %s4, %s2
  $region1: #{tpu_custom_call.1} parent=0
    #allocation2 [shape = 'u8[8192]{0}', space=vmem, size = 0x2000, scoped, tag = 'input window, operand 0, single buffered']
    #allocation3 [shape = 's32[1]{0}', space=sflag, size = 0x4, scoped, tag = 'scoped memory for tpu_custom_call.1']
    #allocation4 [shape = 's32[1]{0}', space=sflag, size = 0x4, scoped, tag = 'scoped memory for tpu_custom_call.1']
    #allocation5 [shape = 'u8[8192]{0}', space=vmem, size = 0x2000, scoped, tag = 'output window, operand 0, single buffered']
    %6 = vsyncpa [#allocation3], 0
    %7 = vsyncpa [#allocation4], 0
    // Predicated region
    $region2: #{tpu_custom_call.1} parent=1 // pred_check
      _
    $region3: #{tpu_custom_call.1} parent=1 // pred_check_branch
      %9 = sbr.rel (0) target = $region5
    $region4: #{tpu_custom_call.1} parent=1 // pred_region
      %s11 = ssub.s32 256, 256
      %12 = vsyncadd [#allocation3], %s11
      %s13 = sshll.u32 [#allocation2], 4
      %s14 = int_to_ptr.vmem [resolvable:$true] %s13
      %19 = dma.hbm_to_vmem [thread:$0]  %s0, 256, %s14, [#allocation3], 128, 128, 8
    $region5: #{tpu_custom_call.1} parent=1 // pred_fallthru
      _
    // Predicated region
    $region6: #{tpu_custom_call.1} parent=1 // pred_check
      _
    $region7: #{tpu_custom_call.1} parent=1 // pred_check_branch
      %21 = sbr.rel (0) target = $region9
    $region8: #{tpu_custom_call.1} parent=1 // pred_region
      %22 = dma.done [#allocation3], 256
    $region9: #{tpu_custom_call.1} parent=1 // pred_fallthru
      _
    %v23 = vld [vmem:[#allocation2] sm:$0xff]
    %v24 = vld [vmem:[#allocation2 + $0x8] sm:$0xff]
    %v25 = vmul.f32 %v23, 0.1
    %v26 = vmul.f32 %v24, 0.1
    %v27 = vmax.f32 %v23, %v25
    %v28 = vmax.f32 %v24, %v26
    %v29 = vsub.f32 %v27, 0.4
    %v30 = vsub.f32 %v28, 0.4
    %v31 = vmin.f32 %v29, 6.0
    %v32 = vmin.f32 %v30, 6.0
    %33 = vst [vmem:[#allocation5] sm:$0xff] %v31
    %34 = vst [vmem:[#allocation5 + $0x8] sm:$0xff] %v32
    // Predicated region
    $region10: #{tpu_custom_call.1} parent=1 // pred_check
      _
    $region11: #{tpu_custom_call.1} parent=1 // pred_check_branch
      %36 = sbr.rel (0) target = $region13
    $region12: #{tpu_custom_call.1} parent=1 // pred_region
      %s38 = ssub.s32 256, 256
      %39 = vsyncadd [#allocation4], %s38
      %s40 = sshll.u32 [#allocation5], 4
      %s41 = int_to_ptr.vmem [resolvable:$true] %s40
      %46 = dma.vmem_to_hbm [thread:$0]  %s41, 256, %s1, [#allocation4], 128, 128, 8
    $region13: #{tpu_custom_call.1} parent=1 // pred_fallthru
      _
    // Predicated region
    $region14: #{tpu_custom_call.1} parent=1 // pred_check
      _
    $region15: #{tpu_custom_call.1} parent=1 // pred_check_branch
      %48 = sbr.rel (0) target = $region17
    $region16: #{tpu_custom_call.1} parent=1 // pred_region
      %49 = dma.done [#allocation4], 256
    $region17: #{tpu_custom_call.1} parent=1 // pred_fallthru
      _
    %50 = vsyncpa [#allocation3], 1
    %51 = vsyncpa [#allocation4], 1

</llo_original>
